<compile_context>
chip_gen: v6e
topology: v6e:2x2x1
jax: 0.10.0
libtpu: 0.0.40
codegen_flags: <defaults>
</compile_context>

<pallas_src>
import functools

import jax
import jax.numpy as jnp
from jax.experimental import pallas as pl
from jax.experimental.pallas import tpu as pltpu

NUM_COMPRESSED_TOKENS = 17
TOTAL_TOKENS = 257


def _compresser_decoder_kernel(x_ref, wf_ref, bf_ref, o_ref):
    # x_ref:  (T, Ct)   lane-dense column tile of X = [T, B*D_padded]
    # wf_ref: (T, T)    fused weight W_dec @ W_comp (resident across grid steps)
    # bf_ref: (T, 1)    fused bias   W_dec @ b_comp + b_dec
    # o_ref:  (T, Ct)
    z = jnp.dot(wf_ref[...], x_ref[...], preferred_element_type=jnp.float32)
    o_ref[...] = (z + bf_ref[...]).astype(o_ref.dtype)


def _pick_col_tile(cols_padded):
    """Largest 128-multiple tile dividing cols_padded, capped for VMEM and v7x.

    Caps:
      * 2048 cols -> double-buffered f32 in+out blocks ~= 8.4 MiB, safe under
        v5e's 16 MiB default scoped VMEM (v6e/v7x have 32 MiB scoped).
      * when cols_padded >= 256, force >= 2 tiles so the "parallel" grid axis
        gives both v7x TensorCores work.
    cols_padded is always a multiple of 128, so a legal tile always exists.
    """
    max_t = min(2048, cols_padded)
    if cols_padded >= 256:
        max_t = min(max_t, cols_padded // 2)
    t = (max_t // 128) * 128
    while t > 128 and cols_padded % t != 0:
        t -= 128
    return max(t, 128)


def compresser_decoder(x, w_comp, b_comp, w_dec, b_dec,
                       compute_dtype=jnp.float32, out_dtype=jnp.float32):
    """x: [B, T, D]. Returns [B, T, D] in out_dtype.

    compute_dtype=jnp.bfloat16 (and optionally out_dtype=bf16) is recommended on
    v6e/v7x when accuracy allows; accumulation is always f32 on the MXU.
    """
    B, T, D = x.shape
    Nc = w_comp.shape[0]
    assert w_comp.shape == (Nc, T)
    assert w_dec.shape == (T, Nc)

    cols = B * D
    cols_padded = ((cols + 127) // 128) * 128
    pad = cols_padded - cols

    # Lane-dense 2-D view: X[t, b*D + d] = x[b, t, d]; zero-pad the column axis
    # to a multiple of 128 so the kernel output tile is never sub-lane-width.
    X = jnp.transpose(x, (1, 0, 2)).reshape(T, cols)
    if pad:
        X = jnp.pad(X, ((0, 0), (0, pad)))
    X = X.astype(compute_dtype)

    # Fuse the two tiny GEMMs (exact, done in f32, cast once):
    #   W_dec @ (W_comp @ X + b_comp) + b_dec
    #     = (W_dec @ W_comp) @ X + (W_dec @ b_comp + b_dec)
    w_dec_f32 = w_dec.astype(jnp.float32)
    w_fused = jnp.dot(w_dec_f32, w_comp.astype(jnp.float32),
                      preferred_element_type=jnp.float32).astype(compute_dtype)
    b_fused = (jnp.dot(w_dec_f32, b_comp.astype(jnp.float32))
               + b_dec.astype(jnp.float32)).reshape(T, 1)

    ct = _pick_col_tile(cols_padded)
    grid = (cols_padded // ct,)

    in_itemsize = jnp.dtype(compute_dtype).itemsize
    out_itemsize = jnp.dtype(out_dtype).itemsize
    flops = 2 * T * T * cols_padded            # single fused GEMM
    bytes_accessed = (
        T * cols_padded * in_itemsize          # X read
        + T * cols_padded * out_itemsize       # out write
        + T * T * in_itemsize                  # fused weight
        + T * 4                                # fused bias (f32)
    )

    out2d = pl.pallas_call(
        _compresser_decoder_kernel,
        out_shape=jax.ShapeDtypeStruct((T, cols_padded), out_dtype),
        grid_spec=pltpu.PrefetchScalarGridSpec(
            num_scalar_prefetch=0,
            grid=grid,
            in_specs=[
                pl.BlockSpec((T, ct), lambda j: (0, j)),   # activation column tile
                pl.BlockSpec((T, T), lambda j: (0, 0)),    # fused weight (constant)
                pl.BlockSpec((T, 1), lambda j: (0, 0)),    # fused bias (constant)
            ],
            out_specs=pl.BlockSpec((T, ct), lambda j: (0, j)),
        ),
        # Column tiles are independent -> "parallel" shards them across v7x's two
        # TensorCores (single TC on v5e/v6e just loops over them).
        compiler_params=pltpu.CompilerParams(
            dimension_semantics=("parallel",),
        ),
        cost_estimate=pl.CostEstimate(
            flops=int(flops),
            transcendentals=0,
            bytes_accessed=int(bytes_accessed),
        ),
    )(X, w_fused, b_fused)

    # Drop padding columns and restore [B, T, D].
    out2d = out2d[:, :cols]
    return jnp.transpose(out2d.reshape(T, B, D), (1, 0, 2))


def _reference(x, w_comp, b_comp, w_dec, b_dec):
    # pure-JAX reference of the PyTorch forward (two separate linears)
    y = jnp.einsum("kt,btd->bkd", w_comp, x) + b_comp[None, :, None]
    z = jnp.einsum("tk,bkd->btd", w_dec, y) + b_dec[None, :, None]
    return z


if __name__ == "__main__":
    B, T, D = 2, TOTAL_TOKENS, 32
    Nc = NUM_COMPRESSED_TOKENS

    key = jax.random.PRNGKey(0)
    kx, kwc, kbc, kwd, kbd = jax.random.split(key, 5)

    x = jax.random.normal(kx, (B, T, D), dtype=jnp.float32)
    # deterministic synthetic parameters (no checkpoint load)
    w_comp = jax.random.normal(kwc, (Nc, T), dtype=jnp.float32) * 0.02
    b_comp = jax.random.normal(kbc, (Nc,), dtype=jnp.float32) * 0.02
    w_dec = jax.random.normal(kwd, (T, Nc), dtype=jnp.float32) * 0.02
    b_dec = jax.random.normal(kbd, (T,), dtype=jnp.float32) * 0.02

    # jit the whole wrapper so the layout transposes fuse with the kernel call.
    fn = jax.jit(functools.partial(compresser_decoder,
                                   compute_dtype=jnp.float32,
                                   out_dtype=jnp.float32))
    out = jax.block_until_ready(fn(x, w_comp, b_comp, w_dec, b_dec))

    ref = _reference(x, w_comp, b_comp, w_dec, b_dec)
    assert out.shape == (B, T, D)
    assert jnp.allclose(out, ref, atol=1e-4, rtol=1e-4), "mismatch vs reference"

    print("KERNEL_OK")
</pallas_src>

<mosaic_0001>
module attributes {stable_mosaic.version = 11 : i64} {
  func.func @_compresser_decoder_kernel(%arg0: i32, %arg1: memref<257x128xf32, #tpu.memory_space<vmem>>, %arg2: memref<257x257xf32, #tpu.memory_space<vmem>>, %arg3: memref<257x1xf32, #tpu.memory_space<vmem>>, %arg4: memref<257x128xf32, #tpu.memory_space<vmem>>) attributes {dimension_semantics = [#tpu.dimension_semantics<parallel>], iteration_bounds = array<i64: 1>, scalar_prefetch = 0 : i64, scratch_operands = 0 : i64, tpu.core_type = #tpu.core_type<tc>, window_params = [{transform_indices = @transform_0, window_bounds = array<i64: 257, 128>}, {pipeline_mode = #tpu.pipeline_mode<synchronous>, transform_indices = @transform_1, window_bounds = array<i64: 257, 257>}, {pipeline_mode = #tpu.pipeline_mode<synchronous>, transform_indices = @transform_2, window_bounds = array<i64: 257, 1>}, {transform_indices = @transform_3, window_bounds = array<i64: 257, 128>}]} {
    %c0 = arith.constant 0 : index
    %c0_0 = arith.constant 0 : index
    %0 = vector.load %arg2[%c0, %c0_0] : memref<257x257xf32, #tpu.memory_space<vmem>>, vector<257x257xf32>
    %c0_1 = arith.constant 0 : index
    %c0_2 = arith.constant 0 : index
    %1 = vector.load %arg1[%c0_1, %c0_2] : memref<257x128xf32, #tpu.memory_space<vmem>>, vector<257x128xf32>
    %cst = arith.constant dense<0.000000e+00> : vector<257x128xf32>
    %2 = tpu.matmul %0, %1, %cst {dimension_numbers = #tpu.dot_dimension_numbers<[1], [0], [0], [1], [0, 0, 1, 1], [], []>} : vector<257x257xf32>, vector<257x128xf32>, vector<257x128xf32> -> vector<257x128xf32>
    %c0_3 = arith.constant 0 : index
    %c0_4 = arith.constant 0 : index
    %3 = vector.load %arg3[%c0_3, %c0_4] : memref<257x1xf32, #tpu.memory_space<vmem>>, vector<257x1xf32>
    %4 = vector.broadcast %3 : vector<257x1xf32> to vector<257x128xf32>
    %5 = arith.addf %2, %4 : vector<257x128xf32>
    %c0_5 = arith.constant 0 : index
    %c0_6 = arith.constant 0 : index
    %6 = vector.load %arg4[%c0_5, %c0_6] : memref<257x128xf32, #tpu.memory_space<vmem>>, vector<257x128xf32>
    tpu.vector_store %arg4[%c0_5, %c0_6], %5 {strides = array<i32>} : memref<257x128xf32, #tpu.memory_space<vmem>>, vector<257x128xf32>,
    return
  }
  func.func @transform_0(%arg0: i32) -> (i32, i32) {
    %c0_i32 = arith.constant 0 : i32
    %c0_i32_0 = arith.constant 0 : i32
    return %c0_i32, %arg0 : i32, i32
  }
  func.func @transform_1(%arg0: i32) -> (i32, i32) {
    %c0_i32 = arith.constant 0 : i32
    %c0_i32_0 = arith.constant 0 : i32
    %c0_i32_1 = arith.constant 0 : i32
    return %c0_i32, %c0_i32_0 : i32, i32
  }
  func.func @transform_2(%arg0: i32) -> (i32, i32) {
    %c0_i32 = arith.constant 0 : i32
    %c0_i32_0 = arith.constant 0 : i32
    %c0_i32_1 = arith.constant 0 : i32
    return %c0_i32, %c0_i32_0 : i32, i32
  }
  func.func @transform_3(%arg0: i32) -> (i32, i32) {
    %c0_i32 = arith.constant 0 : i32
    %c0_i32_0 = arith.constant 0 : i32
    return %c0_i32, %arg0 : i32, i32
  }
}

</mosaic_0001>

<llo_original>
// kernel: compresser_decoder.1
$region0: #{compresser_decoder.1}
  #allocation0 [shape = 'u32[]', space=smem, size = 0x4, offset = 0x4, fixed_abs, tag = 'smem constant byte address 0x4 - core index']
  #allocation1 [shape = 'u32[144,128]{1,0:T(1,128)}', space=vmem, size = 0x12000, scoped, tag = 'internal scratch']
  %s0 = inlined_call_operand.vmem [shape: f32[257,128], index: 0, kind: input, shape index: {}]
  %s1 = inlined_call_operand.vmem [shape: f32[257,257], index: 1, kind: input, shape index: {}]
  %s2 = inlined_call_operand.vmem [shape: f32[257,1], index: 2, kind: input, shape index: {}]
  %s3 = inlined_call_operand.vmem [shape: f32[257,128], index: 3, kind: output, shape index: {}]
  %s4 = sld [smem:[#allocation0]]
  $region22: #{compresser_decoder.1} parent=0
    _
  %s6 = ssub.s32 1, %s4
  %s7 = scalar_select 0, %s6, %s4
  // Predicated region
  $region2: #{compresser_decoder.1} parent=0 // pred_check
    _
  $region3: #{compresser_decoder.1} parent=0 // pred_check_branch
    %9 = sbr.rel (0) target = $region5
  $region4: #{compresser_decoder.1} parent=0 // pred_region
    _
  $region5: #{compresser_decoder.1} parent=0 // pred_fallthru
    _
  // Predicated region
  $region6: #{compresser_decoder.1} parent=0 // pred_check
    _
  $region7: #{compresser_decoder.1} parent=0 // pred_check_branch
    %11 = sbr.rel (0) target = $region9
  $region8: #{compresser_decoder.1} parent=0 // pred_region
    _
  $region9: #{compresser_decoder.1} parent=0 // pred_fallthru
    _
  // Predicated region
  $region10: #{compresser_decoder.1} parent=0 // pred_check
    _
  $region11: #{compresser_decoder.1} parent=0 // pred_check_branch
    %13 = sbr.rel (0) target = $region13
  $region12: #{compresser_decoder.1} parent=0 // pred_region
    _
  $region13: #{compresser_decoder.1} parent=0 // pred_fallthru
    _
  %v14 = vld [vmem:[%s1] sm:$0xff]
  %v15 = vld [vmem:[%s1 + $0x8] sm:$0xff]
  %v16 = vld [vmem:[%s1 + $0x10] sm:$0xff]
  %v17 = vld [vmem:[%s1 + $0x18] sm:$0xff]
  %v18 = vld [vmem:[%s1 + $0x20] sm:$0xff]
  %v19 = vld [vmem:[%s1 + $0x28] sm:$0xff]
  %v20 = vld [vmem:[%s1 + $0x30] sm:$0xff]
  %v21 = vld [vmem:[%s1 + $0x38] sm:$0xff]
  %v22 = vld [vmem:[%s1 + $0x40] sm:$0xff]
  %v23 = vld [vmem:[%s1 + $0x48] sm:$0xff]
  %v24 = vld [vmem:[%s1 + $0x50] sm:$0xff]
  %v25 = vld [vmem:[%s1 + $0x58] sm:$0xff]
  %v26 = vld [vmem:[%s1 + $0x60] sm:$0xff]
  %v27 = vld [vmem:[%s1 + $0x68] sm:$0xff]
  %v28 = vld [vmem:[%s1 + $0x70] sm:$0xff]
  %v29 = vld [vmem:[%s1 + $0x78] sm:$0xff]
  %v30 = vld [vmem:[%s1 + $0x80] sm:$0xff]
  %v31 = vld [vmem:[%s1 + $0x88] sm:$0xff]
  %v32 = vld [vmem:[%s1 + $0x90] sm:$0xff]
  %v33 = vld [vmem:[%s1 + $0x98] sm:$0xff]
  %v34 = vld [vmem:[%s1 + $0xa0] sm:$0xff]
  %v35 = vld [vmem:[%s1 + $0xa8] sm:$0xff]
  %v36 = vld [vmem:[%s1 + $0xb0] sm:$0xff]
  %v37 = vld [vmem:[%s1 + $0xb8] sm:$0xff]
  %v38 = vld [vmem:[%s1 + $0xc0] sm:$0xff]
  %v39 = vld [vmem:[%s1 + $0xc8] sm:$0xff]
  %v40 = vld [vmem:[%s1 + $0xd0] sm:$0xff]
  %v41 = vld [vmem:[%s1 + $0xd8] sm:$0xff]
  %v42 = vld [vmem:[%s1 + $0xe0] sm:$0xff]
  %v43 = vld [vmem:[%s1 + $0xe8] sm:$0xff]
  %v44 = vld [vmem:[%s1 + $0xf0] sm:$0xff]
  %v45 = vld [vmem:[%s1 + $0xf8] sm:$0xff]
  %v46 = vld [vmem:[%s1 + $0x100] sm:$0xff]
  %v47 = vld [vmem:[%s1 + $0x108] sm:$0xff]
  %v48 = vld [vmem:[%s1 + $0x110] sm:$0xff]
  %v49 = vld [vmem:[%s1 + $0x118] sm:$0xff]
  %v50 = vld [vmem:[%s1 + $0x120] sm:$0xff]
  %v51 = vld [vmem:[%s1 + $0x128] sm:$0xff]
  %v52 = vld [vmem:[%s1 + $0x130] sm:$0xff]
  %v53 = vld [vmem:[%s1 + $0x138] sm:$0xff]
  %v54 = vld [vmem:[%s1 + $0x140] sm:$0xff]
  %v55 = vld [vmem:[%s1 + $0x148] sm:$0xff]
  %v56 = vld [vmem:[%s1 + $0x150] sm:$0xff]
  %v57 = vld [vmem:[%s1 + $0x158] sm:$0xff]
  %v58 = vld [vmem:[%s1 + $0x160] sm:$0xff]
  %v59 = vld [vmem:[%s1 + $0x168] sm:$0xff]
  %v60 = vld [vmem:[%s1 + $0x170] sm:$0xff]
  %v61 = vld [vmem:[%s1 + $0x178] sm:$0xff]
  %v62 = vld [vmem:[%s1 + $0x180] sm:$0xff]
  %v63 = vld [vmem:[%s1 + $0x188] sm:$0xff]
  %v64 = vld [vmem:[%s1 + $0x190] sm:$0xff]
  %v65 = vld [vmem:[%s1 + $0x198] sm:$0xff]
  %v66 = vld [vmem:[%s1 + $0x1a0] sm:$0xff]
  %v67 = vld [vmem:[%s1 + $0x1a8] sm:$0xff]
  %v68 = vld [vmem:[%s1 + $0x1b0] sm:$0xff]
  %v69 = vld [vmem:[%s1 + $0x1b8] sm:$0xff]
  %v70 = vld [vmem:[%s1 + $0x1c0] sm:$0xff]
  %v71 = vld [vmem:[%s1 + $0x1c8] sm:$0xff]
  %v72 = vld [vmem:[%s1 + $0x1d0] sm:$0xff]
  %v73 = vld [vmem:[%s1 + $0x1d8] sm:$0xff]
  %v74 = vld [vmem:[%s1 + $0x1e0] sm:$0xff]
  %v75 = vld [vmem:[%s1 + $0x1e8] sm:$0xff]
  %v76 = vld [vmem:[%s1 + $0x1f0] sm:$0xff]
  %v77 = vld [vmem:[%s1 + $0x1f8] sm:$0xff]
  %v78 = vld [vmem:[%s1 + $0x200] sm:$0xff]
  %v79 = vld [vmem:[%s1 + $0x208] sm:$0xff]
  %v80 = vld [vmem:[%s1 + $0x210] sm:$0xff]
  %v81 = vld [vmem:[%s1 + $0x218] sm:$0xff]
  %v82 = vld [vmem:[%s1 + $0x220] sm:$0xff]
  %v83 = vld [vmem:[%s1 + $0x228] sm:$0xff]
  %v84 = vld [vmem:[%s1 + $0x230] sm:$0xff]
  %v85 = vld [vmem:[%s1 + $0x238] sm:$0xff]
  %v86 = vld [vmem:[%s1 + $0x240] sm:$0xff]
  %v87 = vld [vmem:[%s1 + $0x248] sm:$0xff]
  %v88 = vld [vmem:[%s1 + $0x250] sm:$0xff]
  %v89 = vld [vmem:[%s1 + $0x258] sm:$0xff]
  %v90 = vld [vmem:[%s1 + $0x260] sm:$0xff]
  %v91 = vld [vmem:[%s1 + $0x268] sm:$0xff]
  %v92 = vld [vmem:[%s1 + $0x270] sm:$0xff]
  %v93 = vld [vmem:[%s1 + $0x278] sm:$0xff]
  %v94 = vld [vmem:[%s1 + $0x280] sm:$0xff]
  %v95 = vld [vmem:[%s1 + $0x288] sm:$0xff]
  %v96 = vld [vmem:[%s1 + $0x290] sm:$0xff]
  %v97 = vld [vmem:[%s1 + $0x298] sm:$0xff]
  %v98 = vld [vmem:[%s1 + $0x2a0] sm:$0xff]
  %v99 = vld [vmem:[%s1 + $0x2a8] sm:$0xff]
  %v100 = vld [vmem:[%s1 + $0x2b0] sm:$0xff]
  %v101 = vld [vmem:[%s1 + $0x2b8] sm:$0xff]
  %v102 = vld [vmem:[%s1 + $0x2c0] sm:$0xff]
  %v103 = vld [vmem:[%s1 + $0x2c8] sm:$0xff]
  %v104 = vld [vmem:[%s1 + $0x2d0] sm:$0xff]
  %v105 = vld [vmem:[%s1 + $0x2d8] sm:$0xff]
  %v106 = vld [vmem:[%s1 + $0x2e0] sm:$0xff]
  %v107 = vld [vmem:[%s1 + $0x2e8] sm:$0xff]
  %v108 = vld [vmem:[%s1 + $0x2f0] sm:$0xff]
  %v109 = vld [vmem:[%s1 + $0x2f8] sm:$0xff]
  %v110 = vld [vmem:[%s1 + $0x300] sm:$0x1]
  %v111 = vld [vmem:[%s1 + $0x308] sm:$0x1]
  %v112 = vld [vmem:[%s1 + $0x310] sm:$0x1]
  %v113 = vld [vmem:[%s0] sm:$0xff]
  %v114 = vld [vmem:[%s0 + $0x8] sm:$0xff]
  %v115 = vld [vmem:[%s0 + $0x10] sm:$0xff]
  %v116 = vld [vmem:[%s0 + $0x18] sm:$0xff]
  %v117 = vld [vmem:[%s0 + $0x20] sm:$0xff]
  %v118 = vld [vmem:[%s0 + $0x28] sm:$0xff]
  %v119 = vld [vmem:[%s0 + $0x30] sm:$0xff]
  %v120 = vld [vmem:[%s0 + $0x38] sm:$0xff]
  %v121 = vld [vmem:[%s0 + $0x40] sm:$0xff]
  %v122 = vld [vmem:[%s0 + $0x48] sm:$0xff]
  %v123 = vld [vmem:[%s0 + $0x50] sm:$0xff]
  %v124 = vld [vmem:[%s0 + $0x58] sm:$0xff]
  %v125 = vld [vmem:[%s0 + $0x60] sm:$0xff]
  %v126 = vld [vmem:[%s0 + $0x68] sm:$0xff]
  %v127 = vld [vmem:[%s0 + $0x70] sm:$0xff]
  %v128 = vld [vmem:[%s0 + $0x78] sm:$0xff]
  %v129 = vld [vmem:[%s0 + $0x80] sm:$0xff]
  %v130 = vld [vmem:[%s0 + $0x88] sm:$0xff]
  %v131 = vld [vmem:[%s0 + $0x90] sm:$0xff]
  %v132 = vld [vmem:[%s0 + $0x98] sm:$0xff]
  %v133 = vld [vmem:[%s0 + $0xa0] sm:$0xff]
  %v134 = vld [vmem:[%s0 + $0xa8] sm:$0xff]
  %v135 = vld [vmem:[%s0 + $0xb0] sm:$0xff]
  %v136 = vld [vmem:[%s0 + $0xb8] sm:$0xff]
  %v137 = vld [vmem:[%s0 + $0xc0] sm:$0xff]
  %v138 = vld [vmem:[%s0 + $0xc8] sm:$0xff]
  %v139 = vld [vmem:[%s0 + $0xd0] sm:$0xff]
  %v140 = vld [vmem:[%s0 + $0xd8] sm:$0xff]
  %v141 = vld [vmem:[%s0 + $0xe0] sm:$0xff]
  %v142 = vld [vmem:[%s0 + $0xe8] sm:$0xff]
  %v143 = vld [vmem:[%s0 + $0xf0] sm:$0xff]
  %v144 = vld [vmem:[%s0 + $0xf8] sm:$0xff]
  %v145 = vld [vmem:[%s0 + $0x100] sm:$0x1]
  %v146 = vld [vmem:[%s2] sm:$0xff]
  %v147 = vld [vmem:[%s2 + $0x8] sm:$0xff]
  %v148 = vld [vmem:[%s2 + $0x10] sm:$0xff]
  %v149 = vld [vmem:[%s2 + $0x18] sm:$0xff]
  %v150 = vld [vmem:[%s2 + $0x20] sm:$0xff]
  %v151 = vld [vmem:[%s2 + $0x28] sm:$0xff]
  %v152 = vld [vmem:[%s2 + $0x30] sm:$0xff]
  %v153 = vld [vmem:[%s2 + $0x38] sm:$0xff]
  %v154 = vld [vmem:[%s2 + $0x40] sm:$0xff]
  %v155 = vld [vmem:[%s2 + $0x48] sm:$0xff]
  %v156 = vld [vmem:[%s2 + $0x50] sm:$0xff]
  %v157 = vld [vmem:[%s2 + $0x58] sm:$0xff]
  %v158 = vld [vmem:[%s2 + $0x60] sm:$0xff]
  %v159 = vld [vmem:[%s2 + $0x68] sm:$0xff]
  %v160 = vld [vmem:[%s2 + $0x70] sm:$0xff]
  %v161 = vld [vmem:[%s2 + $0x78] sm:$0xff]
  %v162 = vld [vmem:[%s2 + $0x80] sm:$0xff]
  %v163 = vld [vmem:[%s2 + $0x88] sm:$0xff]
  %v164 = vld [vmem:[%s2 + $0x90] sm:$0xff]
  %v165 = vld [vmem:[%s2 + $0x98] sm:$0xff]
  %v166 = vld [vmem:[%s2 + $0xa0] sm:$0xff]
  %v167 = vld [vmem:[%s2 + $0xa8] sm:$0xff]
  %v168 = vld [vmem:[%s2 + $0xb0] sm:$0xff]
  %v169 = vld [vmem:[%s2 + $0xb8] sm:$0xff]
  %v170 = vld [vmem:[%s2 + $0xc0] sm:$0xff]
  %v171 = vld [vmem:[%s2 + $0xc8] sm:$0xff]
  %v172 = vld [vmem:[%s2 + $0xd0] sm:$0xff]
  %v173 = vld [vmem:[%s2 + $0xd8] sm:$0xff]
  %v174 = vld [vmem:[%s2 + $0xe0] sm:$0xff]
  %v175 = vld [vmem:[%s2 + $0xe8] sm:$0xff]
  %v176 = vld [vmem:[%s2 + $0xf0] sm:$0xff]
  %v177 = vld [vmem:[%s2 + $0xf8] sm:$0xff]
  %v178 = vld [vmem:[%s2 + $0x100] sm:$0x1]
  %180 = vset.pattern.permute.xlu0 0
  %181 = vperm.xlu0 %180, %v146
  %v182 = vpop.permute.xlu0 %181
  %185 = vset.pattern.permute.xlu0 0
  %186 = vperm.xlu0 %185, %v147
  %v187 = vpop.permute.xlu0 %186
  %190 = vset.pattern.permute.xlu0 0
  %191 = vperm.xlu0 %190, %v148
  %v192 = vpop.permute.xlu0 %191
  %195 = vset.pattern.permute.xlu0 0
  %196 = vperm.xlu0 %195, %v149
  %v197 = vpop.permute.xlu0 %196
  %200 = vset.pattern.permute.xlu0 0
  %201 = vperm.xlu0 %200, %v150
  %v202 = vpop.permute.xlu0 %201
  %205 = vset.pattern.permute.xlu0 0
  %206 = vperm.xlu0 %205, %v151
  %v207 = vpop.permute.xlu0 %206
  %210 = vset.pattern.permute.xlu0 0
  %211 = vperm.xlu0 %210, %v152
  %v212 = vpop.permute.xlu0 %211
  %215 = vset.pattern.permute.xlu0 0
  %216 = vperm.xlu0 %215, %v153
  %v217 = vpop.permute.xlu0 %216
  %220 = vset.pattern.permute.xlu0 0
  %221 = vperm.xlu0 %220, %v154
  %v222 = vpop.permute.xlu0 %221
  %225 = vset.pattern.permute.xlu0 0
  %226 = vperm.xlu0 %225, %v155
  %v227 = vpop.permute.xlu0 %226
  %230 = vset.pattern.permute.xlu0 0
  %231 = vperm.xlu0 %230, %v156
  %v232 = vpop.permute.xlu0 %231
  %235 = vset.pattern.permute.xlu0 0
  %236 = vperm.xlu0 %235, %v157
  %v237 = vpop.permute.xlu0 %236
  %240 = vset.pattern.permute.xlu0 0
  %241 = vperm.xlu0 %240, %v158
  %v242 = vpop.permute.xlu0 %241
  %245 = vset.pattern.permute.xlu0 0
  %246 = vperm.xlu0 %245, %v159
  %v247 = vpop.permute.xlu0 %246
  %250 = vset.pattern.permute.xlu0 0
  %251 = vperm.xlu0 %250, %v160
  %v252 = vpop.permute.xlu0 %251
  %255 = vset.pattern.permute.xlu0 0
  %256 = vperm.xlu0 %255, %v161
  %v257 = vpop.permute.xlu0 %256
  %260 = vset.pattern.permute.xlu0 0
  %261 = vperm.xlu0 %260, %v162
  %v262 = vpop.permute.xlu0 %261
  %265 = vset.pattern.permute.xlu0 0
  %266 = vperm.xlu0 %265, %v163
  %v267 = vpop.permute.xlu0 %266
  %270 = vset.pattern.permute.xlu0 0
  %271 = vperm.xlu0 %270, %v164
  %v272 = vpop.permute.xlu0 %271
  %275 = vset.pattern.permute.xlu0 0
  %276 = vperm.xlu0 %275, %v165
  %v277 = vpop.permute.xlu0 %276
  %280 = vset.pattern.permute.xlu0 0
  %281 = vperm.xlu0 %280, %v166
  %v282 = vpop.permute.xlu0 %281
  %285 = vset.pattern.permute.xlu0 0
  %286 = vperm.xlu0 %285, %v167
  %v287 = vpop.permute.xlu0 %286
  %290 = vset.pattern.permute.xlu0 0
  %291 = vperm.xlu0 %290, %v168
  %v292 = vpop.permute.xlu0 %291
  %295 = vset.pattern.permute.xlu0 0
  %296 = vperm.xlu0 %295, %v169
  %v297 = vpop.permute.xlu0 %296
  %300 = vset.pattern.permute.xlu0 0
  %301 = vperm.xlu0 %300, %v170
  %v302 = vpop.permute.xlu0 %301
  %305 = vset.pattern.permute.xlu0 0
  %306 = vperm.xlu0 %305, %v171
  %v307 = vpop.permute.xlu0 %306
  %310 = vset.pattern.permute.xlu0 0
  %311 = vperm.xlu0 %310, %v172
  %v312 = vpop.permute.xlu0 %311
  %315 = vset.pattern.permute.xlu0 0
  %316 = vperm.xlu0 %315, %v173
  %v317 = vpop.permute.xlu0 %316
  %320 = vset.pattern.permute.xlu0 0
  %321 = vperm.xlu0 %320, %v174
  %v322 = vpop.permute.xlu0 %321
  %325 = vset.pattern.permute.xlu0 0
  %326 = vperm.xlu0 %325, %v175
  %v327 = vpop.permute.xlu0 %326
  %330 = vset.pattern.permute.xlu0 0
  %331 = vperm.xlu0 %330, %v176
  %v332 = vpop.permute.xlu0 %331
  %335 = vset.pattern.permute.xlu0 0
  %336 = vperm.xlu0 %335, %v177
  %v337 = vpop.permute.xlu0 %336
  %340 = vset.pattern.permute.xlu0 0
  %341 = vperm.xlu0 %340, %v178
  %v342 = vpop.permute.xlu0 %341
  %vm344 = vcmask 7168
  %v346 = vsel %vm344, %v16, 0
  %v349 = vsel %vm344, %v19, 0
  %v352 = vsel %vm344, %v22, 0
  %v355 = vsel %vm344, %v25, 0
  %v358 = vsel %vm344, %v28, 0
  %v361 = vsel %vm344, %v31, 0
  %v364 = vsel %vm344, %v34, 0
  %v367 = vsel %vm344, %v37, 0
  %v370 = vsel %vm344, %v40, 0
  %v373 = vsel %vm344, %v43, 0
  %v376 = vsel %vm344, %v46, 0
  %v379 = vsel %vm344, %v49, 0
  %v382 = vsel %vm344, %v52, 0
  %v385 = vsel %vm344, %v55, 0
  %v388 = vsel %vm344, %v58, 0
  %v391 = vsel %vm344, %v61, 0
  %v394 = vsel %vm344, %v64, 0
  %v397 = vsel %vm344, %v67, 0
  %v400 = vsel %vm344, %v70, 0
  %v403 = vsel %vm344, %v73, 0
  %v406 = vsel %vm344, %v76, 0
  %v409 = vsel %vm344, %v79, 0
  %v412 = vsel %vm344, %v82, 0
  %v415 = vsel %vm344, %v85, 0
  %v418 = vsel %vm344, %v88, 0
  %v421 = vsel %vm344, %v91, 0
  %v424 = vsel %vm344, %v94, 0
  %v427 = vsel %vm344, %v97, 0
  %v430 = vsel %vm344, %v100, 0
  %v433 = vsel %vm344, %v103, 0
  %v436 = vsel %vm344, %v106, 0
  %v439 = vsel %vm344, %v109, 0
  %v442 = vsel %vm344, %v112, 0
  %vm444 = vcmask 1040384
  %v446 = vsel %vm444, %v145, 0
  %448 = vmatprep.subr.mxu0 0.0
  %449 = vmatpush1.msra.mxu0 %v128
  %450 = vmatprep.subr.mxu0 0.0
  %451 = vmatpush1.msra.mxu0 %v127
  %452 = vmatprep.subr.mxu0 0.0
  %453 = vmatpush1.msra.mxu0 %v126
  %454 = vmatprep.subr.mxu0 0.0
  %455 = vmatpush1.msra.mxu0 %v125
  %456 = vmatprep.subr.mxu0 0.0
  %457 = vmatpush1.msra.mxu0 %v124
  %458 = vmatprep.subr.mxu0 0.0
  %459 = vmatpush1.msra.mxu0 %v123
  %460 = vmatprep.subr.mxu0 0.0
  %461 = vmatpush1.msra.mxu0 %v122
  %462 = vmatprep.subr.mxu0 0.0
  %463 = vmatpush1.msra.mxu0 %v121
  %464 = vmatprep.subr.mxu0 0.0
  %465 = vmatpush1.msra.mxu0 %v120
  %466 = vmatprep.subr.mxu0 0.0
  %467 = vmatpush1.msra.mxu0 %v119
  %468 = vmatprep.subr.mxu0 0.0
  %469 = vmatpush1.msra.mxu0 %v118
  %470 = vmatprep.subr.mxu0 0.0
  %471 = vmatpush1.msra.mxu0 %v117
  %472 = vmatprep.subr.mxu0 0.0
  %473 = vmatpush1.msra.mxu0 %v116
  %474 = vmatprep.subr.mxu0 0.0
  %475 = vmatpush1.msra.mxu0 %v115
  %476 = vmatprep.subr.mxu0 0.0
  %477 = vmatpush1.msra.mxu0 %v114
  %478 = vmatprep.subr.mxu0 0.0
  %479 = vmatpush1.msra.mxu0 %v113
  %480 = vmatprep.subr.mxu0 0.0
  %481 = vmatpush2.msra.mxu0 %v144
  %482 = vmatprep.subr.mxu0 0.0
  %483 = vmatpush2.msra.mxu0 %v143
  %484 = vmatprep.subr.mxu0 0.0
  %485 = vmatpush2.msra.mxu0 %v142
  %486 = vmatprep.subr.mxu0 0.0
  %487 = vmatpush2.msra.mxu0 %v141
  %488 = vmatprep.subr.mxu0 0.0
  %489 = vmatpush2.msra.mxu0 %v140
  %490 = vmatprep.subr.mxu0 0.0
  %491 = vmatpush2.msra.mxu0 %v139
  %492 = vmatprep.subr.mxu0 0.0
  %493 = vmatpush2.msra.mxu0 %v138
  %494 = vmatprep.subr.mxu0 0.0
  %495 = vmatpush2.msra.mxu0 %v137
  %496 = vmatprep.subr.mxu0 0.0
  %497 = vmatpush2.msra.mxu0 %v136
  %498 = vmatprep.subr.mxu0 0.0
  %499 = vmatpush2.msra.mxu0 %v135
  %500 = vmatprep.subr.mxu0 0.0
  %501 = vmatpush2.msra.mxu0 %v134
  %502 = vmatprep.subr.mxu0 0.0
  %503 = vmatpush2.msra.mxu0 %v133
  %504 = vmatprep.subr.mxu0 0.0
  %505 = vmatpush2.msra.mxu0 %v132
  %506 = vmatprep.subr.mxu0 0.0
  %507 = vmatpush2.msra.mxu0 %v131
  %508 = vmatprep.subr.mxu0 0.0
  %509 = vmatpush2.msra.mxu0 %v130
  %510 = vmatprep.subr.mxu0 0.0
  %511 = vmatpush2.msra.mxu0 %v129
  %512 = vmatprep.mubr.f32.mxu0 %v15
  %513 = vmatmul.mubr.f32.gmra.mxu0 %v14
  %v514 = vpop.f32.mrf.mxu0
  %v515 = vadd.f32 %v182, %v514
  %v516 = vpop.f32.mrf.mxu0
  %517 = vmatprep.mubr.f32.mxu0 %v18
  %518 = vmatmul.mubr.f32.gmra.mxu0 %v17
  %v519 = vpop.f32.mrf.mxu0
  %v520 = vadd.f32 %v187, %v519
  %v521 = vpop.f32.mrf.mxu0
  %522 = vmatprep.mubr.f32.mxu0 %v21
  %523 = vmatmul.mubr.f32.gmra.mxu0 %v20
  %v524 = vpop.f32.mrf.mxu0
  %v525 = vadd.f32 %v192, %v524
  %v526 = vpop.f32.mrf.mxu0
  %527 = vmatprep.mubr.f32.mxu0 %v24
  %528 = vmatmul.mubr.f32.gmra.mxu0 %v23
  %v529 = vpop.f32.mrf.mxu0
  %v530 = vadd.f32 %v197, %v529
  %v531 = vpop.f32.mrf.mxu0
  %532 = vmatprep.mubr.f32.mxu0 %v27
  %533 = vmatmul.mubr.f32.gmra.mxu0 %v26
  %v534 = vpop.f32.mrf.mxu0
  %v535 = vadd.f32 %v202, %v534
  %v536 = vpop.f32.mrf.mxu0
  %537 = vmatprep.mubr.f32.mxu0 %v30
  %538 = vmatmul.mubr.f32.gmra.mxu0 %v29
  %v539 = vpop.f32.mrf.mxu0
  %v540 = vadd.f32 %v207, %v539
  %v541 = vpop.f32.mrf.mxu0
  %542 = vmatprep.mubr.f32.mxu0 %v33
  %543 = vmatmul.mubr.f32.gmra.mxu0 %v32
  %v544 = vpop.f32.mrf.mxu0
  %v545 = vadd.f32 %v212, %v544
  %v546 = vpop.f32.mrf.mxu0
  %547 = vmatprep.mubr.f32.mxu0 %v36
  %548 = vmatmul.mubr.f32.gmra.mxu0 %v35
  %v549 = vpop.f32.mrf.mxu0
  %v550 = vadd.f32 %v217, %v549
  %v551 = vpop.f32.mrf.mxu0
  %552 = vmatprep.mubr.f32.mxu0 %v39
  %553 = vmatmul.mubr.f32.gmra.mxu0 %v38
  %v554 = vpop.f32.mrf.mxu0
  %v555 = vadd.f32 %v222, %v554
  %v556 = vpop.f32.mrf.mxu0
  %557 = vmatprep.mubr.f32.mxu0 %v42
  %558 = vmatmul.mubr.f32.gmra.mxu0 %v41
  %v559 = vpop.f32.mrf.mxu0
  %v560 = vadd.f32 %v227, %v559
  %v561 = vpop.f32.mrf.mxu0
  %562 = vmatprep.mubr.f32.mxu0 %v45
  %563 = vmatmul.mubr.f32.gmra.mxu0 %v44
  %v564 = vpop.f32.mrf.mxu0
  %v565 = vadd.f32 %v232, %v564
  %v566 = vpop.f32.mrf.mxu0
  %567 = vmatprep.mubr.f32.mxu0 %v48
  %568 = vmatmul.mubr.f32.gmra.mxu0 %v47
  %v569 = vpop.f32.mrf.mxu0
  %v570 = vadd.f32 %v237, %v569
  %v571 = vpop.f32.mrf.mxu0
  %572 = vmatprep.mubr.f32.mxu0 %v51
  %573 = vmatmul.mubr.f32.gmra.mxu0 %v50
  %v574 = vpop.f32.mrf.mxu0
  %v575 = vadd.f32 %v242, %v574
  %v576 = vpop.f32.mrf.mxu0
  %577 = vmatprep.mubr.f32.mxu0 %v54
  %578 = vmatmul.mubr.f32.gmra.mxu0 %v53
  %v579 = vpop.f32.mrf.mxu0
  %v580 = vadd.f32 %v247, %v579
  %v581 = vpop.f32.mrf.mxu0
  %582 = vmatprep.mubr.f32.mxu0 %v57
  %583 = vmatmul.mubr.f32.gmra.mxu0 %v56
  %v584 = vpop.f32.mrf.mxu0
  %v585 = vadd.f32 %v252, %v584
  %v586 = vpop.f32.mrf.mxu0
  %587 = vmatprep.mubr.f32.mxu0 %v60
  %588 = vmatmul.mubr.f32.gmra.mxu0 %v59
  %v589 = vpop.f32.mrf.mxu0
  %v590 = vadd.f32 %v257, %v589
  %v591 = vpop.f32.mrf.mxu0
  %592 = vmatprep.mubr.f32.mxu0 %v63
  %593 = vmatmul.mubr.f32.gmra.mxu0 %v62
  %v594 = vpop.f32.mrf.mxu0
  %v595 = vadd.f32 %v262, %v594
  %v596 = vpop.f32.mrf.mxu0
  %597 = vmatprep.mubr.f32.mxu0 %v66
  %598 = vmatmul.mubr.f32.gmra.mxu0 %v65
  %v599 = vpop.f32.mrf.mxu0
  %v600 = vadd.f32 %v267, %v599
  %v601 = vpop.f32.mrf.mxu0
  %602 = vmatprep.mubr.f32.mxu0 %v69
  %603 = vmatmul.mubr.f32.gmra.mxu0 %v68
  %v604 = vpop.f32.mrf.mxu0
  %v605 = vadd.f32 %v272, %v604
  %v606 = vpop.f32.mrf.mxu0
  %607 = vmatprep.mubr.f32.mxu0 %v72
  %608 = vmatmul.mubr.f32.gmra.mxu0 %v71
  %v609 = vpop.f32.mrf.mxu0
  %v610 = vadd.f32 %v277, %v609
  %v611 = vpop.f32.mrf.mxu0
  %612 = vmatprep.mubr.f32.mxu0 %v75
  %613 = vmatmul.mubr.f32.gmra.mxu0 %v74
  %v614 = vpop.f32.mrf.mxu0
  %v615 = vadd.f32 %v282, %v614
  %v616 = vpop.f32.mrf.mxu0
  %617 = vmatprep.mubr.f32.mxu0 %v78
  %618 = vmatmul.mubr.f32.gmra.mxu0 %v77
  %v619 = vpop.f32.mrf.mxu0
  %v620 = vadd.f32 %v287, %v619
  %v621 = vpop.f32.mrf.mxu0
  %622 = vmatprep.mubr.f32.mxu0 %v81
  %623 = vmatmul.mubr.f32.gmra.mxu0 %v80
  %v624 = vpop.f32.mrf.mxu0
  %v625 = vadd.f32 %v292, %v624
  %v626 = vpop.f32.mrf.mxu0
  %627 = vmatprep.mubr.f32.mxu0 %v84
  %628 = vmatmul.mubr.f32.gmra.mxu0 %v83
  %v629 = vpop.f32.mrf.mxu0
  %v630 = vadd.f32 %v297, %v629
  %v631 = vpop.f32.mrf.mxu0
  %632 = vmatprep.mubr.f32.mxu0 %v87
  %633 = vmatmul.mubr.f32.gmra.mxu0 %v86
  %v634 = vpop.f32.mrf.mxu0
  %v635 = vadd.f32 %v302, %v634
  %v636 = vpop.f32.mrf.mxu0
  %637 = vmatprep.mubr.f32.mxu0 %v90
  %638 = vmatmul.mubr.f32.gmra.mxu0 %v89
  %v639 = vpop.f32.mrf.mxu0
  %v640 = vadd.f32 %v307, %v639
  %v641 = vpop.f32.mrf.mxu0
  %642 = vmatprep.mubr.f32.mxu0 %v93
  %643 = vmatmul.mubr.f32.gmra.mxu0 %v92
  %v644 = vpop.f32.mrf.mxu0
  %v645 = vadd.f32 %v312, %v644
  %v646 = vpop.f32.mrf.mxu0
  %647 = vmatprep.mubr.f32.mxu0 %v96
  %648 = vmatmul.mubr.f32.gmra.mxu0 %v95
  %v649 = vpop.f32.mrf.mxu0
  %v650 = vadd.f32 %v317, %v649
  %v651 = vpop.f32.mrf.mxu0
  %652 = vmatprep.mubr.f32.mxu0 %v99
  %653 = vmatmul.mubr.f32.gmra.mxu0 %v98
  %v654 = vpop.f32.mrf.mxu0
  %v655 = vadd.f32 %v322, %v654
  %v656 = vpop.f32.mrf.mxu0
  %657 = vmatprep.mubr.f32.mxu0 %v102
  %658 = vmatmul.mubr.f32.gmra.mxu0 %v101
  %v659 = vpop.f32.mrf.mxu0
  %v660 = vadd.f32 %v327, %v659
  %v661 = vpop.f32.mrf.mxu0
  %662 = vmatprep.mubr.f32.mxu0 %v105
  %663 = vmatmul.mubr.f32.gmra.mxu0 %v104
  %v664 = vpop.f32.mrf.mxu0
  %v665 = vadd.f32 %v332, %v664
  %v666 = vpop.f32.mrf.mxu0
  %667 = vmatprep.mubr.f32.mxu0 %v108
  %668 = vmatmul.mubr.f32.gmra.mxu0 %v107
  %v669 = vpop.f32.mrf.mxu0
  %v670 = vadd.f32 %v337, %v669
  %v671 = vpop.f32.mrf.mxu0
  %672 = vmatprep.mubr.f32.mxu0 %v111
  %673 = vmatmul.mubr.f32.gmra.mxu0 %v110
  %v674 = vpop.f32.mrf.mxu0
  %v675 = vadd.f32 %v342, %v674
  %v676 = vpop.f32.mrf.mxu0
  %677 = vdwg.mxu0
  %678 = vmatprep.subr.mxu0 0.0
  %679 = vmatpush1.msra.mxu0 0.0
  %680 = vmatprep.subr.mxu0 0.0
  %681 = vmatpush1.msra.mxu0 0.0
  %682 = vmatprep.subr.mxu0 0.0
  %683 = vmatpush1.msra.mxu0 0.0
  %684 = vmatprep.subr.mxu0 0.0
  %685 = vmatpush1.msra.mxu0 0.0
  %686 = vmatprep.subr.mxu0 0.0
  %687 = vmatpush1.msra.mxu0 0.0
  %688 = vmatprep.subr.mxu0 0.0
  %689 = vmatpush1.msra.mxu0 0.0
  %690 = vmatprep.subr.mxu0 0.0
  %691 = vmatpush1.msra.mxu0 0.0
  %692 = vmatprep.subr.mxu0 0.0
  %693 = vmatpush1.msra.mxu0 0.0
  %694 = vmatprep.subr.mxu0 0.0
  %695 = vmatpush1.msra.mxu0 0.0
  %696 = vmatprep.subr.mxu0 0.0
  %697 = vmatpush1.msra.mxu0 0.0
  %698 = vmatprep.subr.mxu0 0.0
  %699 = vmatpush1.msra.mxu0 0.0
  %700 = vmatprep.subr.mxu0 0.0
  %701 = vmatpush1.msra.mxu0 0.0
  %702 = vmatprep.subr.mxu0 0.0
  %703 = vmatpush1.msra.mxu0 0.0
  %704 = vmatprep.subr.mxu0 0.0
  %705 = vmatpush1.msra.mxu0 0.0
  %706 = vmatprep.subr.mxu0 0.0
  %707 = vmatpush1.msra.mxu0 0.0
  %708 = vmatprep.subr.mxu0 0.0
  %709 = vmatpush1.msra.mxu0 %v446
  %710 = vmatprep.subr.mxu0 0.0
  %711 = vmatpush2.msra.mxu0 0.0
  %712 = vmatprep.subr.mxu0 0.0
  %713 = vmatpush2.msra.mxu0 0.0
  %714 = vmatprep.subr.mxu0 0.0
  %715 = vmatpush2.msra.mxu0 0.0
  %716 = vmatprep.subr.mxu0 0.0
  %717 = vmatpush2.msra.mxu0 0.0
  %718 = vmatprep.subr.mxu0 0.0
  %719 = vmatpush2.msra.mxu0 0.0
  %720 = vmatprep.subr.mxu0 0.0
  %721 = vmatpush2.msra.mxu0 0.0
  %722 = vmatprep.subr.mxu0 0.0
  %723 = vmatpush2.msra.mxu0 0.0
  %724 = vmatprep.subr.mxu0 0.0
  %725 = vmatpush2.msra.mxu0 0.0
  %726 = vmatprep.subr.mxu0 0.0
  %727 = vmatpush2.msra.mxu0 0.0
  %728 = vmatprep.subr.mxu0 0.0
  %729 = vmatpush2.msra.mxu0 0.0
  %730 = vmatprep.subr.mxu0 0.0
  %731 = vmatpush2.msra.mxu0 0.0
  %732 = vmatprep.subr.mxu0 0.0
  %733 = vmatpush2.msra.mxu0 0.0
  %734 = vmatprep.subr.mxu0 0.0
  %735 = vmatpush2.msra.mxu0 0.0
  %736 = vmatprep.subr.mxu0 0.0
  %737 = vmatpush2.msra.mxu0 0.0
  %738 = vmatprep.subr.mxu0 0.0
  %739 = vmatpush2.msra.mxu0 0.0
  %740 = vmatprep.subr.mxu0 0.0
  %741 = vmatpush2.msra.mxu0 0.0
  %742 = vmatprep.mubr.f32.mxu0 0.0
  %743 = vmatmul.mubr.f32.gmra.mxu0 %v346
  %v744 = vpop.f32.mrf.mxu0
  %v745 = vadd.f32 %v515, %v744
  %v746 = vpop.f32.mrf.mxu0
  %747 = vmatprep.mubr.f32.mxu0 0.0
  %748 = vmatmul.mubr.f32.gmra.mxu0 %v349
  %v749 = vpop.f32.mrf.mxu0
  %v750 = vadd.f32 %v520, %v749
  %v751 = vpop.f32.mrf.mxu0
  %752 = vmatprep.mubr.f32.mxu0 0.0
  %753 = vmatmul.mubr.f32.gmra.mxu0 %v352
  %v754 = vpop.f32.mrf.mxu0
  %v755 = vadd.f32 %v525, %v754
  %v756 = vpop.f32.mrf.mxu0
  %757 = vmatprep.mubr.f32.mxu0 0.0
  %758 = vmatmul.mubr.f32.gmra.mxu0 %v355
  %v759 = vpop.f32.mrf.mxu0
  %v760 = vadd.f32 %v530, %v759
  %v761 = vpop.f32.mrf.mxu0
  %762 = vmatprep.mubr.f32.mxu0 0.0
  %763 = vmatmul.mubr.f32.gmra.mxu0 %v358
  %v764 = vpop.f32.mrf.mxu0
  %v765 = vadd.f32 %v535, %v764
  %v766 = vpop.f32.mrf.mxu0
  %767 = vmatprep.mubr.f32.mxu0 0.0
  %768 = vmatmul.mubr.f32.gmra.mxu0 %v361
  %v769 = vpop.f32.mrf.mxu0
  %v770 = vadd.f32 %v540, %v769
  %v771 = vpop.f32.mrf.mxu0
  %772 = vmatprep.mubr.f32.mxu0 0.0
  %773 = vmatmul.mubr.f32.gmra.mxu0 %v364
  %v774 = vpop.f32.mrf.mxu0
  %v775 = vadd.f32 %v545, %v774
  %v776 = vpop.f32.mrf.mxu0
  %777 = vmatprep.mubr.f32.mxu0 0.0
  %778 = vmatmul.mubr.f32.gmra.mxu0 %v367
  %v779 = vpop.f32.mrf.mxu0
  %v780 = vadd.f32 %v550, %v779
  %v781 = vpop.f32.mrf.mxu0
  %782 = vmatprep.mubr.f32.mxu0 0.0
  %783 = vmatmul.mubr.f32.gmra.mxu0 %v370
  %v784 = vpop.f32.mrf.mxu0
  %v785 = vadd.f32 %v555, %v784
  %v786 = vpop.f32.mrf.mxu0
  %787 = vmatprep.mubr.f32.mxu0 0.0
  %788 = vmatmul.mubr.f32.gmra.mxu0 %v373
  %v789 = vpop.f32.mrf.mxu0
  %v790 = vadd.f32 %v560, %v789
  %v791 = vpop.f32.mrf.mxu0
  %792 = vmatprep.mubr.f32.mxu0 0.0
  %793 = vmatmul.mubr.f32.gmra.mxu0 %v376
  %v794 = vpop.f32.mrf.mxu0
  %v795 = vadd.f32 %v565, %v794
  %v796 = vpop.f32.mrf.mxu0
  %797 = vmatprep.mubr.f32.mxu0 0.0
  %798 = vmatmul.mubr.f32.gmra.mxu0 %v379
  %v799 = vpop.f32.mrf.mxu0
  %v800 = vadd.f32 %v570, %v799
  %v801 = vpop.f32.mrf.mxu0
  %802 = vmatprep.mubr.f32.mxu0 0.0
  %803 = vmatmul.mubr.f32.gmra.mxu0 %v382
  %v804 = vpop.f32.mrf.mxu0
  %v805 = vadd.f32 %v575, %v804
  %v806 = vpop.f32.mrf.mxu0
  %807 = vmatprep.mubr.f32.mxu0 0.0
  %808 = vmatmul.mubr.f32.gmra.mxu0 %v385
  %v809 = vpop.f32.mrf.mxu0
  %v810 = vadd.f32 %v580, %v809
  %v811 = vpop.f32.mrf.mxu0
  %812 = vmatprep.mubr.f32.mxu0 0.0
  %813 = vmatmul.mubr.f32.gmra.mxu0 %v388
  %v814 = vpop.f32.mrf.mxu0
  %v815 = vadd.f32 %v585, %v814
  %v816 = vpop.f32.mrf.mxu0
  %817 = vmatprep.mubr.f32.mxu0 0.0
  %818 = vmatmul.mubr.f32.gmra.mxu0 %v391
  %v819 = vpop.f32.mrf.mxu0
  %v820 = vadd.f32 %v590, %v819
  %v821 = vpop.f32.mrf.mxu0
  %822 = vmatprep.mubr.f32.mxu0 0.0
  %823 = vmatmul.mubr.f32.gmra.mxu0 %v394
  %v824 = vpop.f32.mrf.mxu0
  %v825 = vadd.f32 %v595, %v824
  %v826 = vpop.f32.mrf.mxu0
  %827 = vmatprep.mubr.f32.mxu0 0.0
  %828 = vmatmul.mubr.f32.gmra.mxu0 %v397
  %v829 = vpop.f32.mrf.mxu0
  %v830 = vadd.f32 %v600, %v829
  %v831 = vpop.f32.mrf.mxu0
  %832 = vmatprep.mubr.f32.mxu0 0.0
  %833 = vmatmul.mubr.f32.gmra.mxu0 %v400
  %v834 = vpop.f32.mrf.mxu0
  %v835 = vadd.f32 %v605, %v834
  %v836 = vpop.f32.mrf.mxu0
  %837 = vmatprep.mubr.f32.mxu0 0.0
  %838 = vmatmul.mubr.f32.gmra.mxu0 %v403
  %v839 = vpop.f32.mrf.mxu0
  %v840 = vadd.f32 %v610, %v839
  %v841 = vpop.f32.mrf.mxu0
  %842 = vmatprep.mubr.f32.mxu0 0.0
  %843 = vmatmul.mubr.f32.gmra.mxu0 %v406
  %v844 = vpop.f32.mrf.mxu0
  %v845 = vadd.f32 %v615, %v844
  %v846 = vpop.f32.mrf.mxu0
  %847 = vmatprep.mubr.f32.mxu0 0.0
  %848 = vmatmul.mubr.f32.gmra.mxu0 %v409
  %v849 = vpop.f32.mrf.mxu0
  %v850 = vadd.f32 %v620, %v849
  %v851 = vpop.f32.mrf.mxu0
  %852 = vmatprep.mubr.f32.mxu0 0.0
  %853 = vmatmul.mubr.f32.gmra.mxu0 %v412
  %v854 = vpop.f32.mrf.mxu0
  %v855 = vadd.f32 %v625, %v854
  %v856 = vpop.f32.mrf.mxu0
  %857 = vmatprep.mubr.f32.mxu0 0.0
  %858 = vmatmul.mubr.f32.gmra.mxu0 %v415
  %v859 = vpop.f32.mrf.mxu0
  %v860 = vadd.f32 %v630, %v859
  %v861 = vpop.f32.mrf.mxu0
  %862 = vmatprep.mubr.f32.mxu0 0.0
  %863 = vmatmul.mubr.f32.gmra.mxu0 %v418
  %v864 = vpop.f32.mrf.mxu0
  %v865 = vadd.f32 %v635, %v864
  %v866 = vpop.f32.mrf.mxu0
  %867 = vmatprep.mubr.f32.mxu0 0.0
  %868 = vmatmul.mubr.f32.gmra.mxu0 %v421
  %v869 = vpop.f32.mrf.mxu0
  %v870 = vadd.f32 %v640, %v869
  %v871 = vpop.f32.mrf.mxu0
  %872 = vmatprep.mubr.f32.mxu0 0.0
  %873 = vmatmul.mubr.f32.gmra.mxu0 %v424
  %v874 = vpop.f32.mrf.mxu0
  %v875 = vadd.f32 %v645, %v874
  %v876 = vpop.f32.mrf.mxu0
  %877 = vmatprep.mubr.f32.mxu0 0.0
  %878 = vmatmul.mubr.f32.gmra.mxu0 %v427
  %v879 = vpop.f32.mrf.mxu0
  %v880 = vadd.f32 %v650, %v879
  %v881 = vpop.f32.mrf.mxu0
  %882 = vmatprep.mubr.f32.mxu0 0.0
  %883 = vmatmul.mubr.f32.gmra.mxu0 %v430
  %v884 = vpop.f32.mrf.mxu0
  %v885 = vadd.f32 %v655, %v884
  %v886 = vpop.f32.mrf.mxu0
  %887 = vmatprep.mubr.f32.mxu0 0.0
  %888 = vmatmul.mubr.f32.gmra.mxu0 %v433
  %v889 = vpop.f32.mrf.mxu0
  %v890 = vadd.f32 %v660, %v889
  %v891 = vpop.f32.mrf.mxu0
  %892 = vmatprep.mubr.f32.mxu0 0.0
  %893 = vmatmul.mubr.f32.gmra.mxu0 %v436
  %v894 = vpop.f32.mrf.mxu0
  %v895 = vadd.f32 %v665, %v894
  %v896 = vpop.f32.mrf.mxu0
  %897 = vmatprep.mubr.f32.mxu0 0.0
  %898 = vmatmul.mubr.f32.gmra.mxu0 %v439
  %v899 = vpop.f32.mrf.mxu0
  %v900 = vadd.f32 %v670, %v899
  %v901 = vpop.f32.mrf.mxu0
  %902 = vmatprep.mubr.f32.mxu0 0.0
  %903 = vmatmul.mubr.f32.gmra.mxu0 %v442
  %v904 = vpop.f32.mrf.mxu0
  %v905 = vadd.f32 %v675, %v904
  %v906 = vpop.f32.mrf.mxu0
  %907 = vdwg.mxu0
  %908 = vst [vmem:[%s3] sm:$0xff] %v745
  %909 = vst [vmem:[%s3 + $0x8] sm:$0xff] %v750
  %910 = vst [vmem:[%s3 + $0x10] sm:$0xff] %v755
  %911 = vst [vmem:[%s3 + $0x18] sm:$0xff] %v760
  %912 = vst [vmem:[%s3 + $0x20] sm:$0xff] %v765
  %913 = vst [vmem:[%s3 + $0x28] sm:$0xff] %v770
  %914 = vst [vmem:[%s3 + $0x30] sm:$0xff] %v775
  %915 = vst [vmem:[%s3 + $0x38] sm:$0xff] %v780
  %916 = vst [vmem:[%s3 + $0x40] sm:$0xff] %v785
  %917 = vst [vmem:[%s3 + $0x48] sm:$0xff] %v790
  %918 = vst [vmem:[%s3 + $0x50] sm:$0xff] %v795
  %919 = vst [vmem:[%s3 + $0x58] sm:$0xff] %v800
  %920 = vst [vmem:[%s3 + $0x60] sm:$0xff] %v805
  %921 = vst [vmem:[%s3 + $0x68] sm:$0xff] %v810
  %922 = vst [vmem:[%s3 + $0x70] sm:$0xff] %v815
  %923 = vst [vmem:[%s3 + $0x78] sm:$0xff] %v820
  %924 = vst [vmem:[%s3 + $0x80] sm:$0xff] %v825
  %925 = vst [vmem:[%s3 + $0x88] sm:$0xff] %v830
  %926 = vst [vmem:[%s3 + $0x90] sm:$0xff] %v835
  %927 = vst [vmem:[%s3 + $0x98] sm:$0xff] %v840
  %928 = vst [vmem:[%s3 + $0xa0] sm:$0xff] %v845
  %929 = vst [vmem:[%s3 + $0xa8] sm:$0xff] %v850
  %930 = vst [vmem:[%s3 + $0xb0] sm:$0xff] %v855
  %931 = vst [vmem:[%s3 + $0xb8] sm:$0xff] %v860
  %932 = vst [vmem:[%s3 + $0xc0] sm:$0xff] %v865
  %933 = vst [vmem:[%s3 + $0xc8] sm:$0xff] %v870
  %934 = vst [vmem:[%s3 + $0xd0] sm:$0xff] %v875
  %935 = vst [vmem:[%s3 + $0xd8] sm:$0xff] %v880
  %936 = vst [vmem:[%s3 + $0xe0] sm:$0xff] %v885
  %937 = vst [vmem:[%s3 + $0xe8] sm:$0xff] %v890
  %938 = vst [vmem:[%s3 + $0xf0] sm:$0xff] %v895
  %939 = vst [vmem:[%s3 + $0xf8] sm:$0xff] %v900
  %940 = vst [vmem:[%s3 + $0x100] sm:$0x1] %v905
  // Predicated region
  $region14: #{compresser_decoder.1} parent=0 // pred_check
    _
  $region15: #{compresser_decoder.1} parent=0 // pred_check_branch
    %942 = sbr.rel (0) target = $region17
  $region16: #{compresser_decoder.1} parent=0 // pred_region
    _
  $region17: #{compresser_decoder.1} parent=0 // pred_fallthru
    _
  // Predicated region
  $region18: #{compresser_decoder.1} parent=0 // pred_check
    _
  $region19: #{compresser_decoder.1} parent=0 // pred_check_branch
    %944 = sbr.rel (0) target = $region21
  $region20: #{compresser_decoder.1} parent=0 // pred_region
    _
  $region21: #{compresser_decoder.1} parent=0 // pred_fallthru
    _

</llo_original>
